<compile_context>
chip_gen: v6e
topology: v6e:2x2x1
jax: 0.10.0
libtpu: 0.0.40
codegen_flags: <defaults>
</compile_context>

<pallas_src>
import functools

import jax
import jax.numpy as jnp
from jax.experimental import pallas as pl
from jax.experimental.pallas import tpu as pltpu


def _round_up(x, m):
    return (x + m - 1) // m * m


def _device_kind():
    try:
        return jax.devices()[0].device_kind.lower()
    except Exception:
        return ""


def _default_compute_dtype():
    # bf16 EUP/VPU exist on v6e and newer; keep f32 on v5e and older.
    kind = _device_kind()
    if ("v6" in kind) or ("v7" in kind) or ("7x" in kind):
        return jnp.bfloat16
    return jnp.float32


def _default_n_splits(n_tiles):
    # Only chips with 2 TensorCores (v7x, v4/v5p megacore) benefit from sharding
    # the phase-1 reduction; single-TC chips would only pay extra zero padding.
    kind = _device_kind()
    two_tc = ("v7" in kind) or ("7x" in kind) or ("v4" in kind) or ("v5p" in kind)
    return 2 if (two_tc and n_tiles >= 2) else 1


def _score_kernel(embeds_ref, w_ref, b_ref, partial_ref, *,
                  n_true, rows_per_split, compute_dtype):
    # embeds_ref: (M, TN, D) f32   w_ref: (D, D) bf16 (PyTorch out x in layout)
    # b_ref: (1, D) f32            partial_ref: (1, M, D) f32 per-core node-sums
    c = pl.program_id(0)                      # TensorCore split ("parallel")
    t = pl.program_id(1)                      # node-tile reduction ("arbitrary")
    M, TN, D = embeds_ref.shape

    @pl.when(t == 0)
    def _():
        partial_ref[...] = jnp.zeros_like(partial_ref)

    # One fused MXU matmul for all M views: (M*TN, D) x (D, D)^T, bf16 in / f32 acc.
    e2d = embeds_ref[...].reshape(M * TN, D).astype(jnp.bfloat16)
    h = jax.lax.dot_general(
        e2d, w_ref[...],
        dimension_numbers=(((1,), (1,)), ((), ())),   # x @ W.T, no transpose copy
        preferred_element_type=jnp.float32,
    )
    # bias + tanh in compute_dtype (bf16 on v6e/v7x, f32 on v5e); node-sum in f32.
    h = jnp.tanh(h.astype(compute_dtype) + b_ref[...].astype(compute_dtype))
    h = h.reshape(M, TN, D).astype(jnp.float32)
    partial_ref[...] += jnp.sum(h, axis=1)[None]

    @pl.when(t == pl.num_programs(1) - 1)
    def _():
        # Padded (zero) node rows each contributed exactly tanh(bias); subtract
        # them once per core instead of masking every tile (mask removed per
        # perf review).  Relies on jnp.pad zero padding in the wrapper.
        pad_rows = jnp.clip((c + 1) * rows_per_split - n_true, 0, rows_per_split)
        tanh_b = jnp.tanh(b_ref[...].astype(compute_dtype)).astype(jnp.float32)
        corr = pad_rows.astype(jnp.float32) * tanh_b                 # (1, D)
        partial_ref[...] = partial_ref[...] - jnp.broadcast_to(corr, (1, M, D))


def _weighted_sum_kernel(beta_ref, embeds_ref, z_ref):
    # beta_ref: (M, 1) f32 in SMEM (cheap scalar reads)
    # embeds_ref: (M, TN, D);  z_ref: (TN, D) lane-dense output tile
    M = embeds_ref.shape[0]
    acc = embeds_ref[0].astype(jnp.float32) * beta_ref[0, 0]
    for m in range(1, M):                      # M is small & static -> unrolled
        acc += embeds_ref[m].astype(jnp.float32) * beta_ref[m, 0]
    z_ref[...] = acc.astype(z_ref.dtype)


def inter_att_forward(embeds, fc_weight, fc_bias, att, *, block_rows=2048,
                      compute_dtype=None, n_splits=None):
    """embeds: (M, N, D) f32; fc_weight: (D, D) PyTorch (out, in) layout;
    fc_bias: (D,); att: (1, D).  Returns (z_mc (N, D), beta (M,))."""
    M, N, D = embeds.shape

    # Node tile: big streaming tile, multiple of 8 (second-minor constraint),
    # clamped to the (rounded-up) node count.
    TN = min(_round_up(block_rows, 8), _round_up(N, 8))
    n_tiles = -(-N // TN)
    if n_splits is None:
        n_splits = _default_n_splits(n_tiles)
    if compute_dtype is None:
        compute_dtype = _default_compute_dtype()

    tiles_per_split = -(-n_tiles // n_splits)
    rows_per_split = tiles_per_split * TN
    N_pad = n_splits * rows_per_split
    embeds_p = (jnp.pad(embeds, ((0, 0), (0, N_pad - N), (0, 0)))
                if N_pad != N else embeds)

    w_bf16 = fc_weight.astype(jnp.bfloat16)          # one-time cast: MXU-native rate
    b2d = fc_bias.reshape(1, D)

    # VMEM budget scales with the tile but stays <= 48 MiB (v7x headroom).
    block_bytes = M * TN * D * 4
    vmem_limit = int(min(48 * 1024 * 1024, max(32 * 1024 * 1024, 6 * block_bytes)))

    # ---- Phase 1: per-core, per-view node-sums of tanh(fc(x)) ----------------
    partial = pl.pallas_call(
        functools.partial(_score_kernel, n_true=N, rows_per_split=rows_per_split,
                          compute_dtype=compute_dtype),
        out_shape=jax.ShapeDtypeStruct((n_splits, M, D), jnp.float32),
        grid=(n_splits, tiles_per_split),
        in_specs=[
            pl.BlockSpec((M, TN, D), lambda c, t: (0, c * tiles_per_split + t, 0)),
            pl.BlockSpec((D, D), lambda c, t: (0, 0)),
            pl.BlockSpec((1, D), lambda c, t: (0, 0)),
        ],
        out_specs=pl.BlockSpec((1, M, D), lambda c, t: (c, 0, 0)),
        compiler_params=pltpu.CompilerParams(
            dimension_semantics=("parallel", "arbitrary"),
            vmem_limit_bytes=vmem_limit),
        cost_estimate=pl.CostEstimate(
            flops=2 * M * N_pad * D * D + 4 * M * N_pad * D,
            transcendentals=M * N_pad * D,
            bytes_accessed=M * N_pad * D * 4 + D * D * 2 + D * 4
                           + n_splits * M * D * 4),
    )(embeds_p, w_bf16, b2d)

    # Tiny finalize in the wrapper (merges the per-core partials as well):
    sp = jnp.sum(partial, axis=0) * (1.0 / N)                  # (M, D) mean over true N
    scores = jnp.sum(att.reshape(1, D) * sp, axis=-1)          # (M,)
    beta = jax.nn.softmax(scores)

    # ---- Phase 2: z = sum_m beta[m] * embeds[m], streamed & parallel over N ---
    n_out_tiles = n_tiles                                      # only cover real rows
    z = pl.pallas_call(
        _weighted_sum_kernel,
        out_shape=jax.ShapeDtypeStruct((n_out_tiles * TN, D), embeds.dtype),
        grid=(n_out_tiles,),
        in_specs=[
            pl.BlockSpec(memory_space=pltpu.MemorySpace.SMEM),   # tiny beta -> SMEM
            pl.BlockSpec((M, TN, D), lambda t: (0, t, 0)),
        ],
        out_specs=pl.BlockSpec((TN, D), lambda t: (t, 0)),
        compiler_params=pltpu.CompilerParams(
            dimension_semantics=("parallel",),
            vmem_limit_bytes=vmem_limit),
        cost_estimate=pl.CostEstimate(
            flops=2 * M * n_out_tiles * TN * D,
            transcendentals=0,
            bytes_accessed=(M + 1) * n_out_tiles * TN * D * 4 + M * 4),
    )(beta.reshape(M, 1), embeds_p)

    return z[:N], beta


def _reference(embeds, fc_weight, fc_bias, att):
    # Pure-JAX f32 reference mirroring the PyTorch forward.
    scores = []
    for m in range(embeds.shape[0]):
        sp = jnp.tanh(embeds[m] @ fc_weight.T + fc_bias).mean(axis=0)   # (D,)
        scores.append(jnp.dot(att[0], sp))
    beta = jax.nn.softmax(jnp.stack(scores))
    z = sum(embeds[m] * beta[m] for m in range(embeds.shape[0]))
    return z, beta


if __name__ == "__main__":
    # 3 metapath views, 200 nodes (exercises the padded/ragged tail), hidden=128
    # (lane-dense output tiles).
    M, N, D = 3, 200, 128
    key = jax.random.PRNGKey(0)
    k_e, k_w, k_b, k_a = jax.random.split(key, 4)

    embeds = jax.random.normal(k_e, (M, N, D), dtype=jnp.float32)

    # Deterministic param init (xavier_normal with gain=1.414).
    xavier_std = 1.414 * (2.0 / (D + D)) ** 0.5
    fc_weight = xavier_std * jax.random.normal(k_w, (D, D), dtype=jnp.float32)
    fc_bias = 0.01 * jax.random.normal(k_b, (D,), dtype=jnp.float32)
    att_std = 1.414 * (2.0 / (1 + D)) ** 0.5
    att = att_std * jax.random.normal(k_a, (1, D), dtype=jnp.float32)

    # Small block_rows so the demo exercises multi-tile accumulation (and the
    # 2-core split on 2-TC chips); production callers keep the 2048-row default.
    z, beta = inter_att_forward(embeds, fc_weight, fc_bias, att, block_rows=128)
    jax.block_until_ready(z)

    z_exp, beta_exp = _reference(embeds, fc_weight, fc_bias, att)
    # The fc matmul (and, on v6e/v7x, the bias+tanh) runs in bf16 with f32
    # accumulation -> compare against the f32 reference with matching tolerance.
    assert jnp.allclose(beta, beta_exp, atol=1e-2, rtol=1e-2), "beta mismatch"
    assert jnp.allclose(z, z_exp, atol=1e-2, rtol=1e-2), "z_mc mismatch"

    print("KERNEL_OK")
</pallas_src>

<mosaic_0001>
module attributes {stable_mosaic.version = 11 : i64} {
  func.func @_score_kernel(%arg0: i32, %arg1: i32, %arg2: memref<3x128x128xf32, #tpu.memory_space<vmem>>, %arg3: memref<128x128xbf16, #tpu.memory_space<vmem>>, %arg4: memref<1x128xf32, #tpu.memory_space<vmem>>, %arg5: memref<1x3x128xf32, #tpu.memory_space<vmem>>) attributes {dimension_semantics = [#tpu.dimension_semantics<parallel>, #tpu.dimension_semantics<arbitrary>], iteration_bounds = array<i64: 1, 2>, scalar_prefetch = 0 : i64, scratch_operands = 0 : i64, tpu.core_type = #tpu.core_type<tc>, window_params = [{transform_indices = @transform_0, window_bounds = array<i64: 3, 128, 128>}, {pipeline_mode = #tpu.pipeline_mode<synchronous>, transform_indices = @transform_1, window_bounds = array<i64: 128, 128>}, {pipeline_mode = #tpu.pipeline_mode<synchronous>, transform_indices = @transform_2, window_bounds = array<i64: 1, 128>}, {transform_indices = @transform_3, window_bounds = array<i64: 1, 3, 128>}]} {
    %c0_i32 = arith.constant 0 : i32
    %0 = arith.cmpi eq, %arg1, %c0_i32 : i32
    %1 = arith.extui %0 : i1 to i32
    %c0_i32_0 = arith.constant 0 : i32
    %2 = arith.cmpi ne, %1, %c0_i32_0 : i32
    scf.if %2 {
      %cst_15 = arith.constant 0.000000e+00 : f32
      %21 = vector.broadcast %cst_15 : f32 to vector<1x3x128xf32>
      %c0_16 = arith.constant 0 : index
      %c0_17 = arith.constant 0 : index
      %c0_18 = arith.constant 0 : index
      %22 = vector.load %arg5[%c0_16, %c0_17, %c0_18] : memref<1x3x128xf32, #tpu.memory_space<vmem>>, vector<1x3x128xf32>
      tpu.vector_store %arg5[%c0_16, %c0_17, %c0_18], %21 {strides = array<i32>} : memref<1x3x128xf32, #tpu.memory_space<vmem>>, vector<1x3x128xf32>,
    } else {
    }
    %c0 = arith.constant 0 : index
    %c0_1 = arith.constant 0 : index
    %c0_2 = arith.constant 0 : index
    %3 = vector.load %arg2[%c0, %c0_1, %c0_2] : memref<3x128x128xf32, #tpu.memory_space<vmem>>, vector<3x128x128xf32>
    %4 = vector.shape_cast %3 : vector<3x128x128xf32> to vector<384x128xf32>
    %5 = arith.truncf %4 : vector<384x128xf32> to vector<384x128xbf16>
    %c0_3 = arith.constant 0 : index
    %c0_4 = arith.constant 0 : index
    %6 = vector.load %arg3[%c0_3, %c0_4] : memref<128x128xbf16, #tpu.memory_space<vmem>>, vector<128x128xbf16>
    %cst = arith.constant dense<0.000000e+00> : vector<384x128xf32>
    %7 = tpu.matmul %5, %6, %cst {dimension_numbers = #tpu.dot_dimension_numbers<[1], [1], [0], [0], [0, 0, 1, 0], [], []>} : vector<384x128xbf16>, vector<128x128xbf16>, vector<384x128xf32> -> vector<384x128xf32>
    %c0_5 = arith.constant 0 : index
    %c0_6 = arith.constant 0 : index
    %8 = vector.load %arg4[%c0_5, %c0_6] : memref<1x128xf32, #tpu.memory_space<vmem>>, vector<1x128xf32>
    %9 = vector.broadcast %8 : vector<1x128xf32> to vector<384x128xf32>
    %10 = arith.addf %7, %9 : vector<384x128xf32>
    %11 = math.tanh %10 : vector<384x128xf32>
    %12 = vector.shape_cast %11 : vector<384x128xf32> to vector<3x128x128xf32>
    %c0_7 = arith.constant 0 : index
    %c0_8 = arith.constant 0 : index
    %c0_9 = arith.constant 0 : index
    %13 = vector.load %arg5[%c0_7, %c0_8, %c0_9] : memref<1x3x128xf32, #tpu.memory_space<vmem>>, vector<1x3x128xf32>
    %cst_10 = arith.constant dense<0.000000e+00> : vector<3x128xf32>
    %14 = vector.multi_reduction <add>, %12, %cst_10 [1] : vector<3x128x128xf32> to vector<3x128xf32>
    %15 = vector.shape_cast %14 : vector<3x128xf32> to vector<1x3x128xf32>
    %16 = arith.addf %13, %15 : vector<1x3x128xf32>
    %c0_11 = arith.constant 0 : index
    %c0_12 = arith.constant 0 : index
    %c0_13 = arith.constant 0 : index
    %17 = vector.load %arg5[%c0_11, %c0_12, %c0_13] : memref<1x3x128xf32, #tpu.memory_space<vmem>>, vector<1x3x128xf32>
    tpu.vector_store %arg5[%c0_11, %c0_12, %c0_13], %16 {strides = array<i32>} : memref<1x3x128xf32, #tpu.memory_space<vmem>>, vector<1x3x128xf32>,
    %c1_i32 = arith.constant 1 : i32
    %18 = arith.cmpi eq, %arg1, %c1_i32 : i32
    %19 = arith.extui %18 : i1 to i32
    %c0_i32_14 = arith.constant 0 : i32
    %20 = arith.cmpi ne, %19, %c0_i32_14 : i32
    scf.if %20 {
      %c1_i32_15 = arith.constant 1 : i32
      %21 = arith.addi %arg0, %c1_i32_15 : i32
      %c256_i32 = arith.constant 256 : i32
      %22 = arith.muli %21, %c256_i32 : i32
      %c200_i32 = arith.constant 200 : i32
      %23 = arith.subi %22, %c200_i32 : i32
      %c0_i32_16 = arith.constant 0 : i32
      %c256_i32_17 = arith.constant 256 : i32
      %24 = arith.maxsi %c0_i32_16, %23 : i32
      %25 = arith.minsi %c256_i32_17, %24 : i32
      %c0_18 = arith.constant 0 : index
      %c0_19 = arith.constant 0 : index
      %26 = vector.load %arg4[%c0_18, %c0_19] : memref<1x128xf32, #tpu.memory_space<vmem>>, vector<1x128xf32>
      %27 = math.tanh %26 : vector<1x128xf32>
      %28 = arith.sitofp %25 : i32 to f32
      %29 = vector.broadcast %28 : f32 to vector<1x128xf32>
      %30 = arith.mulf %29, %27 : vector<1x128xf32>
      %c0_20 = arith.constant 0 : index
      %c0_21 = arith.constant 0 : index
      %c0_22 = arith.constant 0 : index
      %31 = vector.load %arg5[%c0_20, %c0_21, %c0_22] : memref<1x3x128xf32, #tpu.memory_space<vmem>>, vector<1x3x128xf32>
      %32 = vector.shape_cast %30 : vector<1x128xf32> to vector<1x1x128xf32>
      %33 = vector.broadcast %32 : vector<1x1x128xf32> to vector<1x3x128xf32>
      %34 = arith.subf %31, %33 : vector<1x3x128xf32>
      %c0_23 = arith.constant 0 : index
      %c0_24 = arith.constant 0 : index
      %c0_25 = arith.constant 0 : index
      %35 = vector.load %arg5[%c0_23, %c0_24, %c0_25] : memref<1x3x128xf32, #tpu.memory_space<vmem>>, vector<1x3x128xf32>
      tpu.vector_store %arg5[%c0_23, %c0_24, %c0_25], %34 {strides = array<i32>} : memref<1x3x128xf32, #tpu.memory_space<vmem>>, vector<1x3x128xf32>,
    } else {
    }
    return
  }
  func.func @transform_0(%arg0: i32, %arg1: i32) -> (i32, i32, i32) {
    %c2_i32 = arith.constant 2 : i32
    %0 = arith.muli %arg0, %c2_i32 : i32
    %1 = arith.addi %0, %arg1 : i32
    %c0_i32 = arith.constant 0 : i32
    %c0_i32_0 = arith.constant 0 : i32
    %c0_i32_1 = arith.constant 0 : i32
    return %c0_i32, %1, %c0_i32_0 : i32, i32, i32
  }
  func.func @transform_1(%arg0: i32, %arg1: i32) -> (i32, i32) {
    %c0_i32 = arith.constant 0 : i32
    %c0_i32_0 = arith.constant 0 : i32
    %c0_i32_1 = arith.constant 0 : i32
    return %c0_i32, %c0_i32_0 : i32, i32
  }
  func.func @transform_2(%arg0: i32, %arg1: i32) -> (i32, i32) {
    %c0_i32 = arith.constant 0 : i32
    %c0_i32_0 = arith.constant 0 : i32
    %c0_i32_1 = arith.constant 0 : i32
    return %c0_i32, %c0_i32_0 : i32, i32
  }
  func.func @transform_3(%arg0: i32, %arg1: i32) -> (i32, i32, i32) {
    %c0_i32 = arith.constant 0 : i32
    %c0_i32_0 = arith.constant 0 : i32
    %c0_i32_1 = arith.constant 0 : i32
    return %arg0, %c0_i32, %c0_i32_0 : i32, i32, i32
  }
}

</mosaic_0001>

<llo_original>
// kernel: tpu_custom_call.1
$region0: #{tpu_custom_call.1}
  #allocation0 [shape = 'u32[]', space=smem, size = 0x4, offset = 0x4, fixed_abs, tag = 'smem constant byte address 0x4 - core index']
  #allocation1 [shape = 'u32[144,128]{1,0:T(1,128)}', space=vmem, size = 0x12000, scoped, tag = 'internal scratch']
  #allocation6 [shape = 's32[]', space=sflag, size = 0x4, offset = 0, fixed_abs, tag = 'sflag constant byte address 0x0 - dummy sync flag']
  %s0 = inlined_call_operand.hbm [shape: f32[3,256,128], index: 0, kind: input, shape index: {}]
  %s1 = inlined_call_operand.hbm [shape: bf16[128,128], index: 1, kind: input, shape index: {}]
  %s2 = inlined_call_operand.vmem [shape: f32[1,128], index: 2, kind: input, shape index: {}]
  %s3 = inlined_call_operand.vmem [shape: f32[1,3,128], index: 3, kind: output, shape index: {}]
  %s4 = sld [smem:[#allocation0]]
  $region61: #{tpu_custom_call.1} parent=0
    _
  %s6 = ssub.s32 1, %s4
  %s7 = scalar_select 0, %s6, %s4
  $region1: #{tpu_custom_call.1} parent=0
    #allocation2 [shape = 'u8[393216]{0}', space=vmem, size = 0x60000, scoped, tag = 'input window, operand 0']
    #allocation3 [shape = 's32[2]{0}', space=sflag, size = 0x8, scoped, tag = 'scoped memory for tpu_custom_call.1']
    #allocation4 [shape = 'u8[32768]{0}', space=vmem, size = 0x8000, scoped, tag = 'input window, operand 1, single buffered']
    #allocation5 [shape = 's32[1]{0}', space=sflag, size = 0x4, scoped, tag = 'scoped memory for tpu_custom_call.1']
    %8 = vsyncpa [#allocation3], 0
    %s9 = scalar_lea.sflag [#allocation3], 1
    %10 = vsyncpa %s9, 0
    %11 = vsyncpa [#allocation5], 0
    loop: start=0, step=1, limit=4
    $region2: #{tpu_custom_call.1} parent=1 // loop_pre_header
      _
    $region3: #{tpu_custom_call.1} parent=1 // loop_header
      %s13 = sphi 0, %s17
      %p14 = scmp.ge.s32.totalorder %s13, 4
      %s20 = sphi 0, %s32
      %s21 = sphi 0, %s28
      %s22 = sphi 0, %s20
      %s23 = sphi 0, %s21
      %s24 = sphi 0, %s22
      %s25 = sphi 0, %s23
      %s39 = sphi 0, %s41
      %s42 = sphi 0, %s39
      %s43 = sphi 0, %s42
      %s59 = sphi 0, %s43
      %s63 = sphi 0, %s63
      %s65 = sphi 0, %s63
      %s66 = sphi 0, %s65
      %s80 = sphi 0, %s66
      %s84 = sphi 0, %s84
      %s86 = sphi 0, %s84
      %s87 = sphi 0, %s86
      %s101 = sphi 0, %s87
      %s107 = sphi 0, %s109
      %s110 = sphi 0, %s107
      %s111 = sphi 0, %s110
      %s127 = sphi 0, %s111
    $region4: #{tpu_custom_call.1} parent=1 // loop_header_branch
      %16 = sbr.rel (%p14) target = $region8
    $region5: #{tpu_custom_call.1} parent=1 // loop_body
      %s18 = ssub.s32 %s13, 1
      %s19 = ssub.s32 %s13, 2
      %s26 = sadd.s32 1, %s21
      %p27 = scmp.ge.s32.totalorder %s26, 2
      %s28 = scalar_select %p27, 0, %s26
      %s29 = sadd.s32 1, %s20
      %s30 = scalar_select %p27, %s29, %s20
      %p31 = scmp.ge.s32.totalorder %s30, 1
      %s32 = scalar_select %p31, 0, %s30
      %s33 = smul.u32 %s20, 2
      %s34 = sadd.s32 %s33, %s21
      %s35 = smul.u32 %s32, 2
      %s36 = sadd.s32 %s35, %s28
      %s37 = ssub.s32 %s34, %s36
      %p38 = scmp.eq.s32.totalorder %s37, 0
      %s40 = sadd.s32 %s39, 1
      %s41 = scalar_select %p38, %s39, %s40
      %p44 = pneg %p38
      %p45 = scmp.eq.s32.totalorder %s13, 1
      %p46 = por %p44, %p45
      %p47 = scmp.ne.s32.totalorder %s39, %s42
      %p48 = scmp.eq.s32.totalorder %s13, 0
      %p49 = por %p47, %p48
      %p50 = scmp.ne.s32.totalorder %s39, %s42
      %p51 = scmp.eq.s32.totalorder %s18, 1
      %p52 = por %p50, %p51
      %p53 = scmp.ne.s32.totalorder %s42, %s43
      %p54 = scmp.eq.s32.totalorder %s18, 0
      %p55 = por %p53, %p54
      %p56 = scmp.ne.s32.totalorder %s42, %s43
      %p57 = scmp.eq.s32.totalorder %s19, 1
      %p58 = por %p56, %p57
      %p60 = scmp.ne.s32.totalorder %s43, %s59
      %p61 = scmp.eq.s32.totalorder %s19, 0
      %p62 = por %p60, %p61
      %s64 = sadd.s32 %s63, 1
      %p67 = scmp.eq.s32.totalorder %s13, 1
      %p68 = scmp.ne.s32.totalorder %s63, %s65
      %p69 = scmp.eq.s32.totalorder %s13, 0
      %p70 = por %p68, %p69
      %p71 = scmp.ne.s32.totalorder %s63, %s65
      %p72 = scmp.eq.s32.totalorder %s18, 1
      %p73 = por %p71, %p72
      %p74 = scmp.ne.s32.totalorder %s65, %s66
      %p75 = scmp.eq.s32.totalorder %s18, 0
      %p76 = por %p74, %p75
      %p77 = scmp.ne.s32.totalorder %s65, %s66
      %p78 = scmp.eq.s32.totalorder %s19, 1
      %p79 = por %p77, %p78
      %p81 = scmp.ne.s32.totalorder %s66, %s80
      %p82 = scmp.eq.s32.totalorder %s19, 0
      %p83 = por %p81, %p82
      %s85 = sadd.s32 %s84, 1
      %p88 = scmp.eq.s32.totalorder %s13, 1
      %p89 = scmp.ne.s32.totalorder %s84, %s86
      %p90 = scmp.eq.s32.totalorder %s13, 0
      %p91 = por %p89, %p90
      %p92 = scmp.ne.s32.totalorder %s84, %s86
      %p93 = scmp.eq.s32.totalorder %s18, 1
      %p94 = por %p92, %p93
      %p95 = scmp.ne.s32.totalorder %s86, %s87
      %p96 = scmp.eq.s32.totalorder %s18, 0
      %p97 = por %p95, %p96
      %p98 = scmp.ne.s32.totalorder %s86, %s87
      %p99 = scmp.eq.s32.totalorder %s19, 1
      %p100 = por %p98, %p99
      %p102 = scmp.ne.s32.totalorder %s87, %s101
      %p103 = scmp.eq.s32.totalorder %s19, 0
      %p104 = por %p102, %p103
      %s105 = ssub.s32 %s20, %s32
      %p106 = scmp.eq.s32.totalorder %s105, 0
      %s108 = sadd.s32 %s107, 1
      %s109 = scalar_select %p106, %s107, %s108
      %p112 = pneg %p106
      %p113 = scmp.eq.s32.totalorder %s13, 1
      %p114 = por %p112, %p113
      %p115 = scmp.ne.s32.totalorder %s107, %s110
      %p116 = scmp.eq.s32.totalorder %s13, 0
      %p117 = por %p115, %p116
      %p118 = scmp.ne.s32.totalorder %s107, %s110
      %p119 = scmp.eq.s32.totalorder %s18, 1
      %p120 = por %p118, %p119
      %p121 = scmp.ne.s32.totalorder %s110, %s111
      %p122 = scmp.eq.s32.totalorder %s18, 0
      %p123 = por %p121, %p122
      %p124 = scmp.ne.s32.totalorder %s110, %s111
      %p125 = scmp.eq.s32.totalorder %s19, 1
      %p126 = por %p124, %p125
      %p128 = scmp.ne.s32.totalorder %s111, %s127
      %p129 = scmp.eq.s32.totalorder %s19, 0
      %p130 = por %p128, %p129
      %p131 = scmp.le.s32.totalorder 1, %s13
      %p132 = scmp.lt.s32.totalorder %s13, 3
      %p133 = pnand %p131, %p132
      %p134 = pneg %p133
      // Predicated region
      $region9: #{tpu_custom_call.1} parent=5 // pred_check
        _
      $region10: #{tpu_custom_call.1} parent=5 // pred_check_branch
        %136 = sbr.rel (%p133) target = $region12
      $region11: #{tpu_custom_call.1} parent=5 // pred_region
        %s137 = ssub.s32 %s13, 1
        // Predicated region
        $region13: #{tpu_custom_call.1} parent=11 // pred_check
          %p138 = pneg %p76
        $region14: #{tpu_custom_call.1} parent=11 // pred_check_branch
          %140 = sbr.rel (%p138) target = $region16
        $region15: #{tpu_custom_call.1} parent=11 // pred_region
          %s142 = ssub.s32 1024, 1024
          %143 = vsyncadd [#allocation5], %s142
          %s144 = sshll.u32 [#allocation4], 4
          %s145 = int_to_ptr.vmem [resolvable:$true] %s144
          %150 = dma.hbm_to_vmem [thread:$0]  %s1, 1024, %s145, [#allocation5], 64, 64, 4
        $region16: #{tpu_custom_call.1} parent=11 // pred_fallthru
          _
        // Predicated region
        $region17: #{tpu_custom_call.1} parent=11 // pred_check
          %p151 = pneg %p97
        $region18: #{tpu_custom_call.1} parent=11 // pred_check_branch
          %153 = sbr.rel (%p151) target = $region20
        $region19: #{tpu_custom_call.1} parent=11 // pred_region
          _
        $region20: #{tpu_custom_call.1} parent=11 // pred_fallthru
          _
      $region12: #{tpu_custom_call.1} parent=5 // pred_fallthru
        _
      %p154 = scmp.lt.s32.totalorder %s13, 2
      // Predicated region
      $region21: #{tpu_custom_call.1} parent=5 // pred_check
        %p155 = pneg %p154
      $region22: #{tpu_custom_call.1} parent=5 // pred_check_branch
        %157 = sbr.rel (%p155) target = $region24
      $region23: #{tpu_custom_call.1} parent=5 // pred_region
        // Predicated region
        $region25: #{tpu_custom_call.1} parent=23 // pred_check
          %p158 = pneg %p49
        $region26: #{tpu_custom_call.1} parent=23 // pred_check_branch
          %160 = sbr.rel (%p158) target = $region28
        $region27: #{tpu_custom_call.1} parent=23 // pred_region
          #allocation7 [shape = 'u32[6]{0}', space=smem, size = 0x18, scoped, tag = 'DMA stride descriptor']
          %s161 = sand.u32 %s39, 1
          %s162 = scalar_lea.sflag [#allocation3], %s161
          %s163 = sand.u32 %s39, 1
          %s164 = smul.addr %s163, 384
          %s165 = scalar_lea.vmem [#allocation2], %s164
          %s166 = smul.u32 %s20, 2
          %s167 = sadd.s32 %s166, %s21
          %s168 = smul.u32 16, %s167
          %s170 = ssub.s32 6144, 6144
          %171 = vsyncadd %s162, %s170
          %s172 = smul.addr %s168, 128
          %s173 = scalar_lea.hbm %s0, %s172
          %s175 = sshll.u32 1, 14
          %s176 = sxor.u32 4294967295, %s175
          %s178 = sld [smem:[#allocation0]]
          %s179 = sadd.s32 2, %s178
          %s181 = sshll.u32 7, 26
          %s182 = sxor.u32 4294967295, %s181
          %s183 = sand.u32 0, %s182
          %s184 = sshll.u32 %s179, 26
          %s185 = sor.u32 %s183, %s184
          %s186 = sshll.u32 %s165, 4
          %s187 = int_to_ptr.vmem [resolvable:$true] %s186
          %193 = sst [smem:[#allocation7]] 4096
          %s194 = scalar_lea.smem [#allocation7], 1
          %195 = sst [smem:[%s194]] 2048
          %s196 = scalar_lea.smem [#allocation7], 2
          %197 = sst [smem:[%s196]] 16
          %s198 = scalar_lea.smem [#allocation7], 3
          %199 = sst [smem:[%s198]] 128
          %s200 = scalar_lea.smem [#allocation7], 4
          %201 = sst [smem:[%s200]] 128
          %s202 = scalar_lea.smem [#allocation7], 5
          %203 = sst [smem:[%s202]] 8
          %205 = dma.general %s173, 6144, %s187, %s162, 131072, [#allocation7], %s185, 0
        $region28: #{tpu_custom_call.1} parent=23 // pred_fallthru
          _
      $region24: #{tpu_custom_call.1} parent=5 // pred_fallthru
        _
      %p206 = scmp.le.s32.totalorder 1, %s13
      %p207 = scmp.lt.s32.totalorder %s13, 3
      %p208 = pnand %p206, %p207
      %p209 = pneg %p208
      // Predicated region
      $region29: #{tpu_custom_call.1} parent=5 // pred_check
        _
      $region30: #{tpu_custom_call.1} parent=5 // pred_check_branch
        %211 = sbr.rel (%p208) target = $region32
      $region31: #{tpu_custom_call.1} parent=5 // pred_region
        %s212 = ssub.s32 %s13, 1
        %s213 = sand.u32 %s42, 1
        %s214 = scalar_lea.sflag [#allocation3], %s213
        %s215 = sand.u32 %s42, 1
        %s216 = smul.addr %s215, 384
        %s217 = scalar_lea.vmem [#allocation2], %s216
        // Predicated region
        $region33: #{tpu_custom_call.1} parent=31 // pred_check
          %p218 = pneg %p55
        $region34: #{tpu_custom_call.1} parent=31 // pred_check_branch
          %220 = sbr.rel (%p218) target = $region36
        $region35: #{tpu_custom_call.1} parent=31 // pred_region
          %221 = dma.done %s214, 6144
        $region36: #{tpu_custom_call.1} parent=31 // pred_fallthru
          _
        // Predicated region
        $region37: #{tpu_custom_call.1} parent=31 // pred_check
          %p222 = pneg %p76
        $region38: #{tpu_custom_call.1} parent=31 // pred_check_branch
          %224 = sbr.rel (%p222) target = $region40
        $region39: #{tpu_custom_call.1} parent=31 // pred_region
          %225 = dma.done [#allocation5], 1024
        $region40: #{tpu_custom_call.1} parent=31 // pred_fallthru
          _
        %s226 = sand.u32 %s42, 1
        %s227 = scalar_lea.sflag [#allocation3], %s226
        %s228 = sand.u32 %s42, 1
        %s229 = smul.addr %s228, 384
        %s230 = scalar_lea.vmem [#allocation2], %s229
        %p231 = pneg %p55
        %p232 = pneg %p52
        %p233 = pneg %p76
        %p234 = pneg %p73
        %p235 = pneg %p97
        %p236 = pneg %p94
        %p237 = pneg %p123
        %p238 = pneg %p120
        %p239 = scmp.lt.s32.totalorder %s22, 0
        %s240 = scalar_select %p239, %s22, 0
        %s241 = smul.addr %s240, 4
        %s242 = scalar_lea.vmem %s3, %s241
        %s243 = smul.u32 %s22, 2
        %s244 = sadd.s32 %s243, %s23
        %s245 = smul.u32 16, %s244
        %p246 = scmp.lt.s32.totalorder %s22, 0
        %s247 = scalar_select %p246, %s22, 0
        %s248 = smul.addr %s247, 4
        %s249 = scalar_lea.vmem %s3, %s248
        %p251 = scmp.eq.s32.totalorder %s23, 0
        // Predicated region
        $region41: #{tpu_custom_call.1} parent=31 // pred_check
          %p252 = pneg %p251
        $region42: #{tpu_custom_call.1} parent=31 // pred_check_branch
          %254 = sbr.rel (%p252) target = $region44
        $region43: #{tpu_custom_call.1} parent=31 // pred_region
          %255 = vst [vmem:[%s249] sm:$0x7] 0.0
        $region44: #{tpu_custom_call.1} parent=31 // pred_fallthru
          _
        %v256 = vld [vmem:[%s217] sm:$0xff]
        %v257 = vld [vmem:[%s217 + $0x8] sm:$0xff]
        %v258 = vld [vmem:[%s217 + $0x10] sm:$0xff]
        %v259 = vld [vmem:[%s217 + $0x18] sm:$0xff]
        %v260 = vld [vmem:[%s217 + $0x20] sm:$0xff]
        %v261 = vld [vmem:[%s217 + $0x28] sm:$0xff]
        %v262 = vld [vmem:[%s217 + $0x30] sm:$0xff]
        %v263 = vld [vmem:[%s217 + $0x38] sm:$0xff]
        %v264 = vld [vmem:[%s217 + $0x40] sm:$0xff]
        %v265 = vld [vmem:[%s217 + $0x48] sm:$0xff]
        %v266 = vld [vmem:[%s217 + $0x50] sm:$0xff]
        %v267 = vld [vmem:[%s217 + $0x58] sm:$0xff]
        %v268 = vld [vmem:[%s217 + $0x60] sm:$0xff]
        %v269 = vld [vmem:[%s217 + $0x68] sm:$0xff]
        %v270 = vld [vmem:[%s217 + $0x70] sm:$0xff]
        %v271 = vld [vmem:[%s217 + $0x78] sm:$0xff]
        %v272 = vld [vmem:[%s217 + $0x80] sm:$0xff]
        %v273 = vld [vmem:[%s217 + $0x88] sm:$0xff]
        %v274 = vld [vmem:[%s217 + $0x90] sm:$0xff]
        %v275 = vld [vmem:[%s217 + $0x98] sm:$0xff]
        %v276 = vld [vmem:[%s217 + $0xa0] sm:$0xff]
        %v277 = vld [vmem:[%s217 + $0xa8] sm:$0xff]
        %v278 = vld [vmem:[%s217 + $0xb0] sm:$0xff]
        %v279 = vld [vmem:[%s217 + $0xb8] sm:$0xff]
        %v280 = vld [vmem:[%s217 + $0xc0] sm:$0xff]
        %v281 = vld [vmem:[%s217 + $0xc8] sm:$0xff]
        %v282 = vld [vmem:[%s217 + $0xd0] sm:$0xff]
        %v283 = vld [vmem:[%s217 + $0xd8] sm:$0xff]
        %v284 = vld [vmem:[%s217 + $0xe0] sm:$0xff]
        %v285 = vld [vmem:[%s217 + $0xe8] sm:$0xff]
        %v286 = vld [vmem:[%s217 + $0xf0] sm:$0xff]
        %v287 = vld [vmem:[%s217 + $0xf8] sm:$0xff]
        %v288 = vld [vmem:[%s217 + $0x100] sm:$0xff]
        %v289 = vld [vmem:[%s217 + $0x108] sm:$0xff]
        %v290 = vld [vmem:[%s217 + $0x110] sm:$0xff]
        %v291 = vld [vmem:[%s217 + $0x118] sm:$0xff]
        %v292 = vld [vmem:[%s217 + $0x120] sm:$0xff]
        %v293 = vld [vmem:[%s217 + $0x128] sm:$0xff]
        %v294 = vld [vmem:[%s217 + $0x130] sm:$0xff]
        %v295 = vld [vmem:[%s217 + $0x138] sm:$0xff]
        %v296 = vld [vmem:[%s217 + $0x140] sm:$0xff]
        %v297 = vld [vmem:[%s217 + $0x148] sm:$0xff]
        %v298 = vld [vmem:[%s217 + $0x150] sm:$0xff]
        %v299 = vld [vmem:[%s217 + $0x158] sm:$0xff]
        %v300 = vld [vmem:[%s217 + $0x160] sm:$0xff]
        %v301 = vld [vmem:[%s217 + $0x168] sm:$0xff]
        %v302 = vld [vmem:[%s217 + $0x170] sm:$0xff]
        %v303 = vld [vmem:[%s217 + $0x178] sm:$0xff]
        %v304 = vpack.c.bf16 %v257, %v256
        %v305 = vpack.c.bf16 %v259, %v258
        %v306 = vpack.c.bf16 %v261, %v260
        %v307 = vpack.c.bf16 %v263, %v262
        %v308 = vpack.c.bf16 %v265, %v264
        %v309 = vpack.c.bf16 %v267, %v266
        %v310 = vpack.c.bf16 %v269, %v268
        %v311 = vpack.c.bf16 %v271, %v270
        %v312 = vpack.c.bf16 %v273, %v272
        %v313 = vpack.c.bf16 %v275, %v274
        %v314 = vpack.c.bf16 %v277, %v276
        %v315 = vpack.c.bf16 %v279, %v278
        %v316 = vpack.c.bf16 %v281, %v280
        %v317 = vpack.c.bf16 %v283, %v282
        %v318 = vpack.c.bf16 %v285, %v284
        %v319 = vpack.c.bf16 %v287, %v286
        %v320 = vpack.c.bf16 %v289, %v288
        %v321 = vpack.c.bf16 %v291, %v290
        %v322 = vpack.c.bf16 %v293, %v292
        %v323 = vpack.c.bf16 %v295, %v294
        %v324 = vpack.c.bf16 %v297, %v296
        %v325 = vpack.c.bf16 %v299, %v298
        %v326 = vpack.c.bf16 %v301, %v300
        %v327 = vpack.c.bf16 %v303, %v302
        %v328 = vld [vmem:[#allocation4] sm:$0xf]
        %v329 = vld [vmem:[#allocation4 + $0x4] sm:$0xf]
        %v330 = vld [vmem:[#allocation4 + $0x8] sm:$0xf]
        %v331 = vld [vmem:[#allocation4 + $0xc] sm:$0xf]
        %v332 = vld [vmem:[#allocation4 + $0x10] sm:$0xf]
        %v333 = vld [vmem:[#allocation4 + $0x14] sm:$0xf]
        %v334 = vld [vmem:[#allocation4 + $0x18] sm:$0xf]
        %v335 = vld [vmem:[#allocation4 + $0x1c] sm:$0xf]
        %v336 = vld [vmem:[#allocation4 + $0x20] sm:$0xf]
        %v337 = vld [vmem:[#allocation4 + $0x24] sm:$0xf]
        %v338 = vld [vmem:[#allocation4 + $0x28] sm:$0xf]
        %v339 = vld [vmem:[#allocation4 + $0x2c] sm:$0xf]
        %v340 = vld [vmem:[#allocation4 + $0x30] sm:$0xf]
        %v341 = vld [vmem:[#allocation4 + $0x34] sm:$0xf]
        %v342 = vld [vmem:[#allocation4 + $0x38] sm:$0xf]
        %v343 = vld [vmem:[#allocation4 + $0x3c] sm:$0xf]
        %v344 = vld [vmem:[%s2] sm:$0x1]
        %v346 = vlaneseq
        %v347 = vshrl.u32 %v346, 7
        %v348 = vsub.s32 0, %v347
        %v349 = vrot.slane %v344, %v348
        %v367 = vunpack.c.l.b16 %v328
        %v368 = vunpack.c.l.b16 %v329
        %v369 = vunpack.c.l.b16 %v330
        %v370 = vunpack.c.l.b16 %v331
        %v371 = vunpack.c.l.b16 %v332
        %v372 = vunpack.c.l.b16 %v333
        %v373 = vunpack.c.l.b16 %v334
        %v374 = vunpack.c.l.b16 %v335
        %v375 = vunpack.c.l.b16 %v336
        %v376 = vunpack.c.l.b16 %v337
        %v377 = vunpack.c.l.b16 %v338
        %v378 = vunpack.c.l.b16 %v339
        %v379 = vunpack.c.l.b16 %v340
        %v380 = vunpack.c.l.b16 %v341
        %v381 = vunpack.c.l.b16 %v342
        %v382 = vunpack.c.l.b16 %v343
        %v383 = vpack.c.b16 %v368, %v367
        %v384 = vpack.c.b16 %v370, %v369
        %v385 = vpack.c.b16 %v372, %v371
        %v386 = vpack.c.b16 %v374, %v373
        %v387 = vpack.c.b16 %v376, %v375
        %v388 = vpack.c.b16 %v378, %v377
        %v389 = vpack.c.b16 %v380, %v379
        %v390 = vpack.c.b16 %v382, %v381
        %399 = vmatprep.subr.bf16.mxu0 0
        %400 = vmatpush1.bf16.xpose.msra.mxu0 %v390
        %401 = vmatprep.subr.bf16.mxu0 0
        %402 = vmatpush1.bf16.xpose.msra.mxu0 %v389
        %403 = vmatprep.subr.bf16.mxu0 0
        %404 = vmatpush1.bf16.xpose.msra.mxu0 %v388
        %405 = vmatprep.subr.bf16.mxu0 0
        %406 = vmatpush1.bf16.xpose.msra.mxu0 %v387
        %407 = vmatprep.subr.bf16.mxu0 0
        %408 = vmatpush1.bf16.xpose.msra.mxu0 %v386
        %409 = vmatprep.subr.bf16.mxu0 0
        %410 = vmatpush1.bf16.xpose.msra.mxu0 %v385
        %411 = vmatprep.subr.bf16.mxu0 0
        %412 = vmatpush1.bf16.xpose.msra.mxu0 %v384
        %413 = vmatprep.subr.bf16.mxu0 0
        %414 = vmatpush1.bf16.xpose.msra.mxu0 %v383
        %415 = vmatprep.subr.bf16.mxu0 0
        %416 = vmatpush2.bf16.xpose.msra.mxu0 0
        %417 = vmatprep.subr.bf16.mxu0 0
        %418 = vmatpush2.bf16.xpose.msra.mxu0 0
        %419 = vmatprep.subr.bf16.mxu0 0
        %420 = vmatpush2.bf16.xpose.msra.mxu0 0
        %421 = vmatprep.subr.bf16.mxu0 0
        %422 = vmatpush2.bf16.xpose.msra.mxu0 0
        %423 = vmatprep.subr.bf16.mxu0 0
        %424 = vmatpush2.bf16.xpose.msra.mxu0 0
        %425 = vmatprep.subr.bf16.mxu0 0
        %426 = vmatpush2.bf16.xpose.msra.mxu0 0
        %427 = vmatprep.subr.bf16.mxu0 0
        %428 = vmatpush2.bf16.xpose.msra.mxu0 0
        %429 = vmatprep.subr.bf16.mxu0 0
        %430 = vmatpush2.bf16.xpose.msra.mxu0 0
        %431 = vmatprep.mubr.bf16.mxu0 0
        %432 = vmatmul.mubr.bf16.gmra.mxu0 %v304
        %v433 = vpop.f32.mrf.mxu0
        %v434 = vadd.f32 %v349, %v433
        %v435 = vpop.f32.mrf.mxu0
        %v436 = vpop.f32.mrf.mxu0
        %v437 = vadd.f32 %v349, %v436
        %v438 = vpop.f32.mrf.mxu0
        %439 = vmatprep.mubr.bf16.mxu0 0
        %440 = vmatmul.mubr.bf16.gmra.mxu0 %v305
        %v441 = vpop.f32.mrf.mxu0
        %v442 = vadd.f32 %v349, %v441
        %v443 = vpop.f32.mrf.mxu0
        %v444 = vpop.f32.mrf.mxu0
        %v445 = vadd.f32 %v349, %v444
        %v446 = vpop.f32.mrf.mxu0
        %447 = vmatprep.mubr.bf16.mxu0 0
        %448 = vmatmul.mubr.bf16.gmra.mxu0 %v306
        %v449 = vpop.f32.mrf.mxu0
        %v450 = vadd.f32 %v349, %v449
        %v451 = vpop.f32.mrf.mxu0
        %v452 = vpop.f32.mrf.mxu0
        %v453 = vadd.f32 %v349, %v452
        %v454 = vpop.f32.mrf.mxu0
        %455 = vmatprep.mubr.bf16.mxu0 0
        %456 = vmatmul.mubr.bf16.gmra.mxu0 %v307
        %v457 = vpop.f32.mrf.mxu0
        %v458 = vadd.f32 %v349, %v457
        %v459 = vpop.f32.mrf.mxu0
        %v460 = vpop.f32.mrf.mxu0
        %v461 = vadd.f32 %v349, %v460
        %v462 = vpop.f32.mrf.mxu0
        %463 = vmatprep.mubr.bf16.mxu0 0
        %464 = vmatmul.mubr.bf16.gmra.mxu0 %v308
        %v465 = vpop.f32.mrf.mxu0
        %v466 = vadd.f32 %v349, %v465
        %v467 = vpop.f32.mrf.mxu0
        %v468 = vpop.f32.mrf.mxu0
        %v469 = vadd.f32 %v349, %v468
        %v470 = vpop.f32.mrf.mxu0
        %471 = vmatprep.mubr.bf16.mxu0 0
        %472 = vmatmul.mubr.bf16.gmra.mxu0 %v309
        %v473 = vpop.f32.mrf.mxu0
        %v474 = vadd.f32 %v349, %v473
        %v475 = vpop.f32.mrf.mxu0
        %v476 = vpop.f32.mrf.mxu0
        %v477 = vadd.f32 %v349, %v476
        %v478 = vpop.f32.mrf.mxu0
        %479 = vmatprep.mubr.bf16.mxu0 0
        %480 = vmatmul.mubr.bf16.gmra.mxu0 %v310
        %v481 = vpop.f32.mrf.mxu0
        %v482 = vadd.f32 %v349, %v481
        %v483 = vpop.f32.mrf.mxu0
        %v484 = vpop.f32.mrf.mxu0
        %v485 = vadd.f32 %v349, %v484
        %v486 = vpop.f32.mrf.mxu0
        %487 = vmatprep.mubr.bf16.mxu0 0
        %488 = vmatmul.mubr.bf16.gmra.mxu0 %v311
        %v489 = vpop.f32.mrf.mxu0
        %v490 = vadd.f32 %v349, %v489
        %v491 = vpop.f32.mrf.mxu0
        %v492 = vpop.f32.mrf.mxu0
        %v493 = vadd.f32 %v349, %v492
        %v494 = vpop.f32.mrf.mxu0
        %495 = vmatprep.mubr.bf16.mxu0 0
        %496 = vmatmul.mubr.bf16.gmra.mxu0 %v312
        %v497 = vpop.f32.mrf.mxu0
        %v498 = vadd.f32 %v349, %v497
        %v499 = vpop.f32.mrf.mxu0
        %v500 = vpop.f32.mrf.mxu0
        %v501 = vadd.f32 %v349, %v500
        %v502 = vpop.f32.mrf.mxu0
        %503 = vmatprep.mubr.bf16.mxu0 0
        %504 = vmatmul.mubr.bf16.gmra.mxu0 %v313
        %v505 = vpop.f32.mrf.mxu0
        %v506 = vadd.f32 %v349, %v505
        %v507 = vpop.f32.mrf.mxu0
        %v508 = vpop.f32.mrf.mxu0
        %v509 = vadd.f32 %v349, %v508
        %v510 = vpop.f32.mrf.mxu0
        %511 = vmatprep.mubr.bf16.mxu0 0
        %512 = vmatmul.mubr.bf16.gmra.mxu0 %v314
        %v513 = vpop.f32.mrf.mxu0
        %v514 = vadd.f32 %v349, %v513
        %v515 = vpop.f32.mrf.mxu0
        %v516 = vpop.f32.mrf.mxu0
        %v517 = vadd.f32 %v349, %v516
        %v518 = vpop.f32.mrf.mxu0
        %519 = vmatprep.mubr.bf16.mxu0 0
        %520 = vmatmul.mubr.bf16.gmra.mxu0 %v315
        %v521 = vpop.f32.mrf.mxu0
        %v522 = vadd.f32 %v349, %v521
        %v523 = vpop.f32.mrf.mxu0
        %v524 = vpop.f32.mrf.mxu0
        %v525 = vadd.f32 %v349, %v524
        %v526 = vpop.f32.mrf.mxu0
        %527 = vmatprep.mubr.bf16.mxu0 0
        %528 = vmatmul.mubr.bf16.gmra.mxu0 %v316
        %v529 = vpop.f32.mrf.mxu0
        %v530 = vadd.f32 %v349, %v529
        %v531 = vpop.f32.mrf.mxu0
        %v532 = vpop.f32.mrf.mxu0
        %v533 = vadd.f32 %v349, %v532
        %v534 = vpop.f32.mrf.mxu0
        %535 = vmatprep.mubr.bf16.mxu0 0
        %536 = vmatmul.mubr.bf16.gmra.mxu0 %v317
        %v537 = vpop.f32.mrf.mxu0
        %v538 = vadd.f32 %v349, %v537
        %v539 = vpop.f32.mrf.mxu0
        %v540 = vpop.f32.mrf.mxu0
        %v541 = vadd.f32 %v349, %v540
        %v542 = vpop.f32.mrf.mxu0
        %543 = vmatprep.mubr.bf16.mxu0 0
        %544 = vmatmul.mubr.bf16.gmra.mxu0 %v318
        %v545 = vpop.f32.mrf.mxu0
        %v546 = vadd.f32 %v349, %v545
        %v547 = vpop.f32.mrf.mxu0
        %v548 = vpop.f32.mrf.mxu0
        %v549 = vadd.f32 %v349, %v548
        %v550 = vpop.f32.mrf.mxu0
        %551 = vmatprep.mubr.bf16.mxu0 0
        %552 = vmatmul.mubr.bf16.gmra.mxu0 %v319
        %v553 = vpop.f32.mrf.mxu0
        %v554 = vadd.f32 %v349, %v553
        %v555 = vpop.f32.mrf.mxu0
        %v556 = vpop.f32.mrf.mxu0
        %v557 = vadd.f32 %v349, %v556
        %v558 = vpop.f32.mrf.mxu0
        %559 = vmatprep.mubr.bf16.mxu0 0
        %560 = vmatmul.mubr.bf16.gmra.mxu0 %v320
        %v561 = vpop.f32.mrf.mxu0
        %v562 = vadd.f32 %v349, %v561
        %v563 = vpop.f32.mrf.mxu0
        %v564 = vpop.f32.mrf.mxu0
        %v565 = vadd.f32 %v349, %v564
        %v566 = vpop.f32.mrf.mxu0
        %567 = vmatprep.mubr.bf16.mxu0 0
        %568 = vmatmul.mubr.bf16.gmra.mxu0 %v321
        %v569 = vpop.f32.mrf.mxu0
        %v570 = vadd.f32 %v349, %v569
        %v571 = vpop.f32.mrf.mxu0
        %v572 = vpop.f32.mrf.mxu0
        %v573 = vadd.f32 %v349, %v572
        %v574 = vpop.f32.mrf.mxu0
        %575 = vmatprep.mubr.bf16.mxu0 0
        %576 = vmatmul.mubr.bf16.gmra.mxu0 %v322
        %v577 = vpop.f32.mrf.mxu0
        %v578 = vadd.f32 %v349, %v577
        %v579 = vpop.f32.mrf.mxu0
        %v580 = vpop.f32.mrf.mxu0
        %v581 = vadd.f32 %v349, %v580
        %v582 = vpop.f32.mrf.mxu0
        %583 = vmatprep.mubr.bf16.mxu0 0
        %584 = vmatmul.mubr.bf16.gmra.mxu0 %v323
        %v585 = vpop.f32.mrf.mxu0
        %v586 = vadd.f32 %v349, %v585
        %v587 = vpop.f32.mrf.mxu0
        %v588 = vpop.f32.mrf.mxu0
        %v589 = vadd.f32 %v349, %v588
        %v590 = vpop.f32.mrf.mxu0
        %591 = vmatprep.mubr.bf16.mxu0 0
        %592 = vmatmul.mubr.bf16.gmra.mxu0 %v324
        %v593 = vpop.f32.mrf.mxu0
        %v594 = vadd.f32 %v349, %v593
        %v595 = vpop.f32.mrf.mxu0
        %v596 = vpop.f32.mrf.mxu0
        %v597 = vadd.f32 %v349, %v596
        %v598 = vpop.f32.mrf.mxu0
        %599 = vmatprep.mubr.bf16.mxu0 0
        %600 = vmatmul.mubr.bf16.gmra.mxu0 %v325
        %v601 = vpop.f32.mrf.mxu0
        %v602 = vadd.f32 %v349, %v601
        %v603 = vpop.f32.mrf.mxu0
        %v604 = vpop.f32.mrf.mxu0
        %v605 = vadd.f32 %v349, %v604
        %v606 = vpop.f32.mrf.mxu0
        %607 = vmatprep.mubr.bf16.mxu0 0
        %608 = vmatmul.mubr.bf16.gmra.mxu0 %v326
        %v609 = vpop.f32.mrf.mxu0
        %v610 = vadd.f32 %v349, %v609
        %v611 = vpop.f32.mrf.mxu0
        %v612 = vpop.f32.mrf.mxu0
        %v613 = vadd.f32 %v349, %v612
        %v614 = vpop.f32.mrf.mxu0
        %615 = vmatprep.mubr.bf16.mxu0 0
        %616 = vmatmul.mubr.bf16.gmra.mxu0 %v327
        %v617 = vpop.f32.mrf.mxu0
        %v618 = vadd.f32 %v349, %v617
        %v619 = vpop.f32.mrf.mxu0
        %v620 = vpop.f32.mrf.mxu0
        %v621 = vadd.f32 %v349, %v620
        %v622 = vpop.f32.mrf.mxu0
        %623 = vdwg.mxu0
        %v624 = vtanh.pop %v434
        %v625 = vtanh.pop %v437
        %v626 = vtanh.pop %v442
        %v627 = vtanh.pop %v445
        %v628 = vtanh.pop %v450
        %v629 = vtanh.pop %v453
        %v630 = vtanh.pop %v458
        %v631 = vtanh.pop %v461
        %v632 = vtanh.pop %v466
        %v633 = vtanh.pop %v469
        %v634 = vtanh.pop %v474
        %v635 = vtanh.pop %v477
        %v636 = vtanh.pop %v482
        %v637 = vtanh.pop %v485
        %v638 = vtanh.pop %v490
        %v639 = vtanh.pop %v493
        %v640 = vtanh.pop %v498
        %v641 = vtanh.pop %v501
        %v642 = vtanh.pop %v506
        %v643 = vtanh.pop %v509
        %v644 = vtanh.pop %v514
        %v645 = vtanh.pop %v517
        %v646 = vtanh.pop %v522
        %v647 = vtanh.pop %v525
        %v648 = vtanh.pop %v530
        %v649 = vtanh.pop %v533
        %v650 = vtanh.pop %v538
        %v651 = vtanh.pop %v541
        %v652 = vtanh.pop %v546
        %v653 = vtanh.pop %v549
        %v654 = vtanh.pop %v554
        %v655 = vtanh.pop %v557
        %v656 = vtanh.pop %v562
        %v657 = vtanh.pop %v565
        %v658 = vtanh.pop %v570
        %v659 = vtanh.pop %v573
        %v660 = vtanh.pop %v578
        %v661 = vtanh.pop %v581
        %v662 = vtanh.pop %v586
        %v663 = vtanh.pop %v589
        %v664 = vtanh.pop %v594
        %v665 = vtanh.pop %v597
        %v666 = vtanh.pop %v602
        %v667 = vtanh.pop %v605
        %v668 = vtanh.pop %v610
        %v669 = vtanh.pop %v613
        %v670 = vtanh.pop %v618
        %v671 = vtanh.pop %v621
        %v672 = vld [vmem:[%s249] sm:$0x7]
        %v673 = vadd.f32 %v624, %v625
        %v674 = vadd.f32 %v673, %v626
        %v675 = vadd.f32 %v674, %v627
        %v676 = vadd.f32 %v675, %v628
        %v677 = vadd.f32 %v676, %v629
        %v678 = vadd.f32 %v677, %v630
        %v679 = vadd.f32 %v678, %v631
        %v680 = vadd.f32 %v679, %v632
        %v681 = vadd.f32 %v680, %v633
        %v682 = vadd.f32 %v681, %v634
        %v683 = vadd.f32 %v682, %v635
        %v684 = vadd.f32 %v683, %v636
        %v685 = vadd.f32 %v684, %v637
        %v686 = vadd.f32 %v685, %v638
        %v687 = vadd.f32 %v686, %v639
        %v688 = vrot.slane %v687, 4
        %v689 = vadd.f32 %v687, %v688
        %v690 = vrot.slane %v689, 2
        %v691 = vadd.f32 %v689, %v690
        %v692 = vrot.slane %v691, 1
        %v693 = vadd.f32 %v691, %v692
        %v694 = vadd.f32 %v640, %v641
        %v695 = vadd.f32 %v694, %v642
        %v696 = vadd.f32 %v695, %v643
        %v697 = vadd.f32 %v696, %v644
        %v698 = vadd.f32 %v697, %v645
        %v699 = vadd.f32 %v698, %v646
        %v700 = vadd.f32 %v699, %v647
        %v701 = vadd.f32 %v700, %v648
        %v702 = vadd.f32 %v701, %v649
        %v703 = vadd.f32 %v702, %v650
        %v704 = vadd.f32 %v703, %v651
        %v705 = vadd.f32 %v704, %v652
        %v706 = vadd.f32 %v705, %v653
        %v707 = vadd.f32 %v706, %v654
        %v708 = vadd.f32 %v707, %v655
        %v709 = vrot.slane %v708, 4
        %v710 = vadd.f32 %v708, %v709
        %v711 = vrot.slane %v710, 2
        %v712 = vadd.f32 %v710, %v711
        %v713 = vrot.slane %v712, 1
        %v714 = vadd.f32 %v712, %v713
        %v715 = vadd.f32 %v656, %v657
        %v716 = vadd.f32 %v715, %v658
        %v717 = vadd.f32 %v716, %v659
        %v718 = vadd.f32 %v717, %v660
        %v719 = vadd.f32 %v718, %v661
        %v720 = vadd.f32 %v719, %v662
        %v721 = vadd.f32 %v720, %v663
        %v722 = vadd.f32 %v721, %v664
        %v723 = vadd.f32 %v722, %v665
        %v724 = vadd.f32 %v723, %v666
        %v725 = vadd.f32 %v724, %v667
        %v726 = vadd.f32 %v725, %v668
        %v727 = vadd.f32 %v726, %v669
        %v728 = vadd.f32 %v727, %v670
        %v729 = vadd.f32 %v728, %v671
        %v730 = vrot.slane %v729, 4
        %v731 = vadd.f32 %v729, %v730
        %v732 = vrot.slane %v731, 2
        %v733 = vadd.f32 %v731, %v732
        %v734 = vrot.slane %v733, 1
        %v735 = vadd.f32 %v733, %v734
        %vm739 = vcmask 1041409
        %v740 = vsel %vm739, %v714, %v693
        %vm741 = vcmask 1042434
        %v742 = vsel %vm741, %v735, %v740
        %v744 = vadd.f32 %v672, %v742
        %745 = vst [vmem:[%s249] sm:$0x7] %v744
        %p746 = scmp.eq.s32.totalorder %s23, 1
        // Predicated region
        $region45: #{tpu_custom_call.1} parent=31 // pred_check
          %p747 = pneg %p746
        $region46: #{tpu_custom_call.1} parent=31 // pred_check_branch
          %749 = sbr.rel (%p747) target = $region48
        $region47: #{tpu_custom_call.1} parent=31 // pred_region
          %s750 = sadd.s32 %s22, 1
          %s751 = smul.u32 %s750, 256
          %s752 = ssub.s32 %s751, 200
          %p753 = scmp.gt.s32.totalorder %s752, 0
          %s754 = scalar_select %p753, %s752, 0
          %p755 = scmp.lt.s32.totalorder %s754, 256
          %s756 = scalar_select %p755, %s754, 256
          %v757 = vld [vmem:[%s2] sm:$0x1]
          %v758 = vtanh.pop %v757
          %s759 = scvt.s32.f32 %s756
          %v760 = vstv %s759
          %v761 = vmul.f32 %v760, %v758
          %v762 = vld [vmem:[%s249] sm:$0x7]
          %v764 = vlaneseq
          %v765 = vshrl.u32 %v764, 7
          %v766 = vsub.s32 0, %v765
          %v767 = vrot.slane %v761, %v766
          %v769 = vsub.f32 %v762, %v767
          %770 = vst [vmem:[%s249] sm:$0x7] %v769
        $region48: #{tpu_custom_call.1} parent=31 // pred_fallthru
          _
        %p771 = scmp.lt.s32.totalorder %s22, 0
        %s772 = scalar_select %p771, %s22, 0
        %s773 = smul.addr %s772, 4
        %s774 = scalar_lea.vmem %s3, %s773
        // Predicated region
        $region49: #{tpu_custom_call.1} parent=31 // pred_check
          %p775 = pneg %p120
        $region50: #{tpu_custom_call.1} parent=31 // pred_check_branch
          %777 = sbr.rel (%p775) target = $region52
        $region51: #{tpu_custom_call.1} parent=31 // pred_region
          _
        $region52: #{tpu_custom_call.1} parent=31 // pred_fallthru
          _
        // Predicated region
        $region53: #{tpu_custom_call.1} parent=31 // pred_check
          %p778 = pneg %p120
        $region54: #{tpu_custom_call.1} parent=31 // pred_check_branch
          %780 = sbr.rel (%p778) target = $region56
        $region55: #{tpu_custom_call.1} parent=31 // pred_region
          %p781 = scmp.lt.s32.totalorder %s22, 0
          %s782 = scalar_select %p781, %s22, 0
          %s783 = smul.addr %s782, 4
          %s784 = scalar_lea.vmem %s3, %s783
        $region56: #{tpu_custom_call.1} parent=31 // pred_fallthru
          _
      $region32: #{tpu_custom_call.1} parent=5 // pred_fallthru
        _
      %p785 = scmp.le.s32.totalorder 2, %s13
      // Predicated region
      $region57: #{tpu_custom_call.1} parent=5 // pred_check
        %p786 = pneg %p785
      $region58: #{tpu_custom_call.1} parent=5 // pred_check_branch
        %788 = sbr.rel (%p786) target = $region60
      $region59: #{tpu_custom_call.1} parent=5 // pred_region
        %s789 = ssub.s32 %s13, 2
      $region60: #{tpu_custom_call.1} parent=5 // pred_fallthru
        _
    $region6: #{tpu_custom_call.1} parent=1 // loop_footer
      %s17 = sadd.s32 1, %s13
    $region7: #{tpu_custom_call.1} parent=1 // loop_footer_branch
      %12 = sbr.rel target = $region3
    $region8: #{tpu_custom_call.1} parent=1 // loop_exit
      _
    %790 = vsyncpa [#allocation3], 1
    %s791 = scalar_lea.sflag [#allocation3], 1
    %792 = vsyncpa %s791, 1
    %793 = vsyncpa [#allocation5], 1

</llo_original>
